<compile_context>
chip_gen: v7x
topology: tpu7x:2x2x1
jax: 0.10.0
libtpu: 0.0.40
codegen_flags: <defaults>
</compile_context>

<pallas_src>
import functools

import jax
import jax.numpy as jnp
from jax import lax
from jax.experimental import pallas as pl
from jax.experimental.pallas import tpu as pltpu


def _dice_partial_kernel(p_ref, t_ref, inter_ref, dn_ref, *,
                         tile_s, valid_s, blocks_per_par, needs_mask):
    i = pl.program_id(0)          # parallel chunk (megacore axis)
    j = pl.program_id(1)          # spatial tile within the chunk (reduction)

    @pl.when(j == 0)
    def _():
        inter_ref[...] = jnp.zeros_like(inter_ref)
        dn_ref[...] = jnp.zeros_like(dn_ref)

    bc = p_ref.shape[0]
    n_groups = tile_s // 128

    if needs_mask:
        # Hoisted once per step (JAX does not CSE broadcast_in_dim).
        lane = lax.broadcasted_iota(jnp.int32, (bc, 128), 1)
        base = (i * blocks_per_par + j) * tile_s   # logical global column base

    inter_p = jnp.zeros((bc, 128), jnp.float32)
    dn_p = jnp.zeros((bc, 128), jnp.float32)
    for g in range(n_groups):                      # per-chunk loads; VPU adds only
        lo = g * 128
        pg = p_ref[:, lo:lo + 128].astype(jnp.float32)
        tg = t_ref[:, lo:lo + 128].astype(jnp.float32)
        prod = tg * pg
        ssum = tg + pg
        if needs_mask:
            valid = (base + lo + lane) < valid_s
            prod = jnp.where(valid, prod, 0.0)
            ssum = jnp.where(valid, ssum, 0.0)
        inter_p = inter_p + prod
        dn_p = dn_p + ssum

    inter_ref[...] += inter_p
    dn_ref[...] += dn_p


def dice_loss(pred, target, *, eps=1e-6, dims=3, max_tile_s=8192):
    assert pred.shape == target.shape
    if dims == 3:
        red = 3
    elif dims == 2:
        red = 2
    else:
        raise ValueError("dims must be 2 or 3")

    lead = pred.shape[:-red]            # (B, C)
    assert len(lead) == 2, "expects (B, C, *spatial) inputs"
    bc = lead[0] * lead[1]
    s = 1
    for d in pred.shape[-red:]:
        s *= d

    p2 = pred.reshape(bc, s)            # native dtype; cast to f32 inside kernel
    t2 = target.reshape(bc, s)

    # ---- tile sizing (no HBM padding; ragged tail masked in-kernel) -------
    bytes_per_col = 2 * bc * (p2.dtype.itemsize + t2.dtype.itemsize)  # 2 bufs/input
    vmem_budget = 24 * 1024 * 1024      # safe for v7x's smaller VMEM
    tile_s = min(max_tile_s, max(128, vmem_budget // max(bytes_per_col, 1)))
    tile_s = min(tile_s, ((s + 127) // 128) * 128)
    tile_s = max(128, (tile_s // 128) * 128)

    n_blocks = pl.cdiv(s, tile_s)
    n_par = 2 if n_blocks >= 2 else 1   # both TensorCores on v7x
    bpp = pl.cdiv(n_blocks, n_par)      # spatial blocks per parallel chunk
    needs_mask = (s % tile_s != 0) or (n_par * bpp != n_blocks)

    if n_par * bpp == n_blocks:
        def in_map(i, j):
            return (0, i * bpp + j)
    else:
        def in_map(i, j):
            # Clamp trailing out-of-range logical blocks; their data is fully
            # masked to zero inside the kernel.
            return (0, jnp.minimum(i * bpp + j, n_blocks - 1))

    kernel = functools.partial(
        _dice_partial_kernel,
        tile_s=tile_s, valid_s=s, blocks_per_par=bpp, needs_mask=needs_mask)

    cost = pl.CostEstimate(
        flops=3 * bc * s,
        transcendentals=0,
        bytes_accessed=bc * s * (p2.dtype.itemsize + t2.dtype.itemsize)
        + 2 * n_par * bc * 128 * 4)

    inter, dn = pl.pallas_call(
        kernel,
        out_shape=(jax.ShapeDtypeStruct((n_par, bc, 128), jnp.float32),
                   jax.ShapeDtypeStruct((n_par, bc, 128), jnp.float32)),
        grid_spec=pltpu.PrefetchScalarGridSpec(
            num_scalar_prefetch=0,
            grid=(n_par, bpp),
            in_specs=[
                pl.BlockSpec((bc, tile_s), in_map),
                pl.BlockSpec((bc, tile_s), in_map),
            ],
            out_specs=[
                pl.BlockSpec((None, bc, 128), lambda i, j: (i, 0, 0)),
                pl.BlockSpec((None, bc, 128), lambda i, j: (i, 0, 0)),
            ],
        ),
        compiler_params=pltpu.CompilerParams(
            dimension_semantics=("parallel", "arbitrary"),
            vmem_limit_bytes=32 * 1024 * 1024,
        ),
        cost_estimate=cost,
    )(p2, t2)

    # Tiny epilogue in plain JAX (outputs are (n_par, bc, 128) partials).
    inter_rows = jnp.sum(inter, axis=(0, 2))          # (bc,)
    dn_rows = jnp.sum(dn, axis=(0, 2)) + eps
    return -jnp.mean(2.0 * inter_rows / dn_rows)


def _dice_loss_ref(pred, target, *, eps=1e-6, dims=3):
    axes = tuple(range(-dims, 0))
    inter = jnp.sum(target * pred, axis=axes)
    dn = jnp.sum(target + pred, axis=axes) + eps
    return -jnp.mean(2.0 * inter / dn)


if __name__ == "__main__":
    key = jax.random.PRNGKey(0)
    k1, k2, k3, k4 = jax.random.split(key, 4)

    # --- test 1: aligned spatial extent, f32, dims=3 -----------------------
    B, C, D, H, W = 2, 4, 4, 16, 16
    pred = jax.nn.sigmoid(jax.random.normal(k1, (B, C, D, H, W), jnp.float32))
    target = (jax.random.uniform(k2, (B, C, D, H, W)) > 0.5).astype(jnp.float32)
    out = jax.block_until_ready(dice_loss(pred, target, eps=1e-6, dims=3))
    ref = _dice_loss_ref(pred, target, eps=1e-6, dims=3)
    assert jnp.allclose(out, ref, atol=1e-5, rtol=1e-5), (out, ref)

    # --- test 2: ragged spatial extent + multi-block parallel grid ---------
    B2, C2, D2, H2, W2 = 2, 4, 3, 10, 10            # s = 300, not a multiple of 128
    pred2 = jax.nn.sigmoid(jax.random.normal(k3, (B2, C2, D2, H2, W2), jnp.float32))
    target2 = (jax.random.uniform(k4, (B2, C2, D2, H2, W2)) > 0.5).astype(jnp.float32)
    out2 = jax.block_until_ready(
        dice_loss(pred2, target2, eps=1e-6, dims=3, max_tile_s=128))
    ref2 = _dice_loss_ref(pred2, target2, eps=1e-6, dims=3)
    assert jnp.allclose(out2, ref2, atol=1e-5, rtol=1e-5), (out2, ref2)

    # --- test 3: bf16 inputs stream at half the HBM bytes -------------------
    out3 = jax.block_until_ready(
        dice_loss(pred.astype(jnp.bfloat16), target.astype(jnp.bfloat16),
                  eps=1e-6, dims=3))
    ref3 = _dice_loss_ref(pred.astype(jnp.bfloat16).astype(jnp.float32),
                          target.astype(jnp.bfloat16).astype(jnp.float32),
                          eps=1e-6, dims=3)
    assert jnp.allclose(out3, ref3, atol=1e-4, rtol=1e-4), (out3, ref3)

    print("KERNEL_OK")
</pallas_src>

<mosaic_0001>
module attributes {stable_mosaic.version = 11 : i64} {
  func.func @_dice_partial_kernel(%arg0: i32, %arg1: i32, %arg2: memref<8x1024xf32, #tpu.memory_space<vmem>>, %arg3: memref<8x1024xf32, #tpu.memory_space<vmem>>, %arg4: memref<1x8x128xf32, #tpu.memory_space<vmem>>, %arg5: memref<1x8x128xf32, #tpu.memory_space<vmem>>) attributes {dimension_semantics = [#tpu.dimension_semantics<parallel>, #tpu.dimension_semantics<arbitrary>], iteration_bounds = array<i64: 1, 1>, scalar_prefetch = 0 : i64, scratch_operands = 0 : i64, tpu.core_type = #tpu.core_type<tc>, window_params = [{transform_indices = @transform_0, window_bounds = array<i64: 8, 1024>}, {transform_indices = @transform_1, window_bounds = array<i64: 8, 1024>}, {transform_indices = @transform_2, window_bounds = array<i64: 1, 8, 128>}, {transform_indices = @transform_3, window_bounds = array<i64: 1, 8, 128>}]} {
    %c0_i32 = arith.constant 0 : i32
    %0 = arith.cmpi eq, %arg1, %c0_i32 : i32
    %1 = arith.extui %0 : i1 to i32
    %c0_i32_0 = arith.constant 0 : i32
    %2 = arith.cmpi ne, %1, %c0_i32_0 : i32
    scf.if %2 {
      %cst_38 = arith.constant 0.000000e+00 : f32
      %65 = vector.broadcast %cst_38 : f32 to vector<8x128xf32>
      %c0_39 = arith.constant 0 : index
      %c0_40 = arith.constant 0 : index
      %c0_41 = arith.constant 0 : index
      %66 = vector.load %arg4[%c0_39, %c0_40, %c0_41] : memref<1x8x128xf32, #tpu.memory_space<vmem>>, vector<1x8x128xf32>
      %67 = vector.shape_cast %66 : vector<1x8x128xf32> to vector<8x128xf32>
      %68 = vector.shape_cast %65 : vector<8x128xf32> to vector<1x8x128xf32>
      tpu.vector_store %arg4[%c0_39, %c0_40, %c0_41], %68 {strides = array<i32>} : memref<1x8x128xf32, #tpu.memory_space<vmem>>, vector<1x8x128xf32>,
      %cst_42 = arith.constant 0.000000e+00 : f32
      %69 = vector.broadcast %cst_42 : f32 to vector<8x128xf32>
      %c0_43 = arith.constant 0 : index
      %c0_44 = arith.constant 0 : index
      %c0_45 = arith.constant 0 : index
      %70 = vector.load %arg5[%c0_43, %c0_44, %c0_45] : memref<1x8x128xf32, #tpu.memory_space<vmem>>, vector<1x8x128xf32>
      %71 = vector.shape_cast %70 : vector<1x8x128xf32> to vector<8x128xf32>
      %72 = vector.shape_cast %69 : vector<8x128xf32> to vector<1x8x128xf32>
      tpu.vector_store %arg5[%c0_43, %c0_44, %c0_45], %72 {strides = array<i32>} : memref<1x8x128xf32, #tpu.memory_space<vmem>>, vector<1x8x128xf32>,
    } else {
    }
    %cst = arith.constant 0.000000e+00 : f32
    %3 = vector.broadcast %cst : f32 to vector<8x128xf32>
    %cst_1 = arith.constant 0.000000e+00 : f32
    %4 = vector.broadcast %cst_1 : f32 to vector<8x128xf32>
    %c0 = arith.constant 0 : index
    %c0_2 = arith.constant 0 : index
    %5 = vector.load %arg2[%c0, %c0_2] : memref<8x1024xf32, #tpu.memory_space<vmem>>, vector<8x128xf32>
    %c0_3 = arith.constant 0 : index
    %c0_4 = arith.constant 0 : index
    %6 = vector.load %arg3[%c0_3, %c0_4] : memref<8x1024xf32, #tpu.memory_space<vmem>>, vector<8x128xf32>
    %7 = arith.mulf %6, %5 : vector<8x128xf32>
    %8 = arith.addf %6, %5 : vector<8x128xf32>
    %9 = arith.addf %3, %7 : vector<8x128xf32>
    %10 = arith.addf %4, %8 : vector<8x128xf32>
    %c0_5 = arith.constant 0 : index
    %c128 = arith.constant 128 : index
    %11 = vector.load %arg2[%c0_5, %c128] : memref<8x1024xf32, #tpu.memory_space<vmem>>, vector<8x128xf32>
    %c0_6 = arith.constant 0 : index
    %c128_7 = arith.constant 128 : index
    %12 = vector.load %arg3[%c0_6, %c128_7] : memref<8x1024xf32, #tpu.memory_space<vmem>>, vector<8x128xf32>
    %13 = arith.mulf %12, %11 : vector<8x128xf32>
    %14 = arith.addf %12, %11 : vector<8x128xf32>
    %15 = arith.addf %9, %13 : vector<8x128xf32>
    %16 = arith.addf %10, %14 : vector<8x128xf32>
    %c0_8 = arith.constant 0 : index
    %c256 = arith.constant 256 : index
    %17 = vector.load %arg2[%c0_8, %c256] : memref<8x1024xf32, #tpu.memory_space<vmem>>, vector<8x128xf32>
    %c0_9 = arith.constant 0 : index
    %c256_10 = arith.constant 256 : index
    %18 = vector.load %arg3[%c0_9, %c256_10] : memref<8x1024xf32, #tpu.memory_space<vmem>>, vector<8x128xf32>
    %19 = arith.mulf %18, %17 : vector<8x128xf32>
    %20 = arith.addf %18, %17 : vector<8x128xf32>
    %21 = arith.addf %15, %19 : vector<8x128xf32>
    %22 = arith.addf %16, %20 : vector<8x128xf32>
    %c0_11 = arith.constant 0 : index
    %c384 = arith.constant 384 : index
    %23 = vector.load %arg2[%c0_11, %c384] : memref<8x1024xf32, #tpu.memory_space<vmem>>, vector<8x128xf32>
    %c0_12 = arith.constant 0 : index
    %c384_13 = arith.constant 384 : index
    %24 = vector.load %arg3[%c0_12, %c384_13] : memref<8x1024xf32, #tpu.memory_space<vmem>>, vector<8x128xf32>
    %25 = arith.mulf %24, %23 : vector<8x128xf32>
    %26 = arith.addf %24, %23 : vector<8x128xf32>
    %27 = arith.addf %21, %25 : vector<8x128xf32>
    %28 = arith.addf %22, %26 : vector<8x128xf32>
    %c0_14 = arith.constant 0 : index
    %c512 = arith.constant 512 : index
    %29 = vector.load %arg2[%c0_14, %c512] : memref<8x1024xf32, #tpu.memory_space<vmem>>, vector<8x128xf32>
    %c0_15 = arith.constant 0 : index
    %c512_16 = arith.constant 512 : index
    %30 = vector.load %arg3[%c0_15, %c512_16] : memref<8x1024xf32, #tpu.memory_space<vmem>>, vector<8x128xf32>
    %31 = arith.mulf %30, %29 : vector<8x128xf32>
    %32 = arith.addf %30, %29 : vector<8x128xf32>
    %33 = arith.addf %27, %31 : vector<8x128xf32>
    %34 = arith.addf %28, %32 : vector<8x128xf32>
    %c0_17 = arith.constant 0 : index
    %c640 = arith.constant 640 : index
    %35 = vector.load %arg2[%c0_17, %c640] : memref<8x1024xf32, #tpu.memory_space<vmem>>, vector<8x128xf32>
    %c0_18 = arith.constant 0 : index
    %c640_19 = arith.constant 640 : index
    %36 = vector.load %arg3[%c0_18, %c640_19] : memref<8x1024xf32, #tpu.memory_space<vmem>>, vector<8x128xf32>
    %37 = arith.mulf %36, %35 : vector<8x128xf32>
    %38 = arith.addf %36, %35 : vector<8x128xf32>
    %39 = arith.addf %33, %37 : vector<8x128xf32>
    %40 = arith.addf %34, %38 : vector<8x128xf32>
    %c0_20 = arith.constant 0 : index
    %c768 = arith.constant 768 : index
    %41 = vector.load %arg2[%c0_20, %c768] : memref<8x1024xf32, #tpu.memory_space<vmem>>, vector<8x128xf32>
    %c0_21 = arith.constant 0 : index
    %c768_22 = arith.constant 768 : index
    %42 = vector.load %arg3[%c0_21, %c768_22] : memref<8x1024xf32, #tpu.memory_space<vmem>>, vector<8x128xf32>
    %43 = arith.mulf %42, %41 : vector<8x128xf32>
    %44 = arith.addf %42, %41 : vector<8x128xf32>
    %45 = arith.addf %39, %43 : vector<8x128xf32>
    %46 = arith.addf %40, %44 : vector<8x128xf32>
    %c0_23 = arith.constant 0 : index
    %c896 = arith.constant 896 : index
    %47 = vector.load %arg2[%c0_23, %c896] : memref<8x1024xf32, #tpu.memory_space<vmem>>, vector<8x128xf32>
    %c0_24 = arith.constant 0 : index
    %c896_25 = arith.constant 896 : index
    %48 = vector.load %arg3[%c0_24, %c896_25] : memref<8x1024xf32, #tpu.memory_space<vmem>>, vector<8x128xf32>
    %49 = arith.mulf %48, %47 : vector<8x128xf32>
    %50 = arith.addf %48, %47 : vector<8x128xf32>
    %51 = arith.addf %45, %49 : vector<8x128xf32>
    %52 = arith.addf %46, %50 : vector<8x128xf32>
    %c0_26 = arith.constant 0 : index
    %c0_27 = arith.constant 0 : index
    %c0_28 = arith.constant 0 : index
    %53 = vector.load %arg4[%c0_26, %c0_27, %c0_28] : memref<1x8x128xf32, #tpu.memory_space<vmem>>, vector<1x8x128xf32>
    %54 = vector.shape_cast %53 : vector<1x8x128xf32> to vector<8x128xf32>
    %55 = arith.addf %54, %51 : vector<8x128xf32>
    %c0_29 = arith.constant 0 : index
    %c0_30 = arith.constant 0 : index
    %c0_31 = arith.constant 0 : index
    %56 = vector.load %arg4[%c0_29, %c0_30, %c0_31] : memref<1x8x128xf32, #tpu.memory_space<vmem>>, vector<1x8x128xf32>
    %57 = vector.shape_cast %56 : vector<1x8x128xf32> to vector<8x128xf32>
    %58 = vector.shape_cast %55 : vector<8x128xf32> to vector<1x8x128xf32>
    tpu.vector_store %arg4[%c0_29, %c0_30, %c0_31], %58 {strides = array<i32>} : memref<1x8x128xf32, #tpu.memory_space<vmem>>, vector<1x8x128xf32>,
    %c0_32 = arith.constant 0 : index
    %c0_33 = arith.constant 0 : index
    %c0_34 = arith.constant 0 : index
    %59 = vector.load %arg5[%c0_32, %c0_33, %c0_34] : memref<1x8x128xf32, #tpu.memory_space<vmem>>, vector<1x8x128xf32>
    %60 = vector.shape_cast %59 : vector<1x8x128xf32> to vector<8x128xf32>
    %61 = arith.addf %60, %52 : vector<8x128xf32>
    %c0_35 = arith.constant 0 : index
    %c0_36 = arith.constant 0 : index
    %c0_37 = arith.constant 0 : index
    %62 = vector.load %arg5[%c0_35, %c0_36, %c0_37] : memref<1x8x128xf32, #tpu.memory_space<vmem>>, vector<1x8x128xf32>
    %63 = vector.shape_cast %62 : vector<1x8x128xf32> to vector<8x128xf32>
    %64 = vector.shape_cast %61 : vector<8x128xf32> to vector<1x8x128xf32>
    tpu.vector_store %arg5[%c0_35, %c0_36, %c0_37], %64 {strides = array<i32>} : memref<1x8x128xf32, #tpu.memory_space<vmem>>, vector<1x8x128xf32>,
    return
  }
  func.func @transform_0(%arg0: i32, %arg1: i32) -> (i32, i32) {
    %c1_i32 = arith.constant 1 : i32
    %0 = arith.muli %arg0, %c1_i32 : i32
    %1 = arith.addi %0, %arg1 : i32
    %c0_i32 = arith.constant 0 : i32
    %c0_i32_0 = arith.constant 0 : i32
    return %c0_i32, %1 : i32, i32
  }
  func.func @transform_1(%arg0: i32, %arg1: i32) -> (i32, i32) {
    %c1_i32 = arith.constant 1 : i32
    %0 = arith.muli %arg0, %c1_i32 : i32
    %1 = arith.addi %0, %arg1 : i32
    %c0_i32 = arith.constant 0 : i32
    %c0_i32_0 = arith.constant 0 : i32
    return %c0_i32, %1 : i32, i32
  }
  func.func @transform_2(%arg0: i32, %arg1: i32) -> (i32, i32, i32) {
    %c0_i32 = arith.constant 0 : i32
    %c0_i32_0 = arith.constant 0 : i32
    %c0_i32_1 = arith.constant 0 : i32
    return %arg0, %c0_i32, %c0_i32_0 : i32, i32, i32
  }
  func.func @transform_3(%arg0: i32, %arg1: i32) -> (i32, i32, i32) {
    %c0_i32 = arith.constant 0 : i32
    %c0_i32_0 = arith.constant 0 : i32
    %c0_i32_1 = arith.constant 0 : i32
    return %arg0, %c0_i32, %c0_i32_0 : i32, i32, i32
  }
}

</mosaic_0001>

<llo_original>
// kernel: tpu_custom_call.1
$region0: #{tpu_custom_call.1}
  #allocation0 [shape = 'u32[]', space=smem, size = 0x4, offset = 0x4, fixed_abs, tag = 'smem constant byte address 0x4 - core index']
  #allocation1 [shape = 'u32[144,128]{1,0:T(1,128)}', space=vmem, size = 0x12000, scoped, tag = 'internal scratch']
  %s0 = inlined_call_operand.hbm [shape: f32[8,1024], index: 0, kind: input, shape index: {}]
  %s1 = inlined_call_operand.hbm [shape: f32[8,1024], index: 1, kind: input, shape index: {}]
  %s2 = inlined_call_operand.hbm [shape: f32[1,8,128], index: 2, kind: output, shape index: {0}]
  %s3 = inlined_call_operand.hbm [shape: f32[1,8,128], index: 3, kind: output, shape index: {1}]
  %4 = xla_tuple %s2, %s3
  %s5 = sld [smem:[#allocation0]]
  $region38: #{tpu_custom_call.1} parent=0
    _
  %s7 = ssub.s32 1, %s5
  %s8 = scalar_select 0, %s7, %s5
  $region1: #{tpu_custom_call.1} parent=0
    #allocation2 [shape = 'u8[32768]{0}', space=vmem, size = 0x8000, scoped, tag = 'input window, operand 0, single buffered']
    #allocation3 [shape = 's32[1]{0}', space=sflag, size = 0x4, scoped, tag = 'scoped memory for tpu_custom_call.1']
    #allocation4 [shape = 's32[1]{0}', space=sflag, size = 0x4, scoped, tag = 'scoped memory for tpu_custom_call.1']
    #allocation5 [shape = 'u8[32768]{0}', space=vmem, size = 0x8000, scoped, tag = 'input window, operand 1, single buffered']
    #allocation6 [shape = 's32[1]{0}', space=sflag, size = 0x4, scoped, tag = 'scoped memory for tpu_custom_call.1']
    #allocation7 [shape = 'u8[4096]{0}', space=vmem, size = 0x1000, scoped, tag = 'output window, operand 0, single buffered']
    #allocation8 [shape = 'u8[4096]{0}', space=vmem, size = 0x1000, scoped, tag = 'output window, operand 1, single buffered']
    #allocation9 [shape = 's32[1]{0}', space=sflag, size = 0x4, scoped, tag = 'scoped memory for tpu_custom_call.1']
    %9 = vsyncpa [#allocation3], 0
    %10 = vsyncpa [#allocation6], 0
    %11 = vsyncpa [#allocation4], 0
    %12 = vsyncpa [#allocation9], 0
    // Predicated region
    $region2: #{tpu_custom_call.1} parent=1 // pred_check
      _
    $region3: #{tpu_custom_call.1} parent=1 // pred_check_branch
      %14 = sbr.rel (0) target = $region5
    $region4: #{tpu_custom_call.1} parent=1 // pred_region
      %s15 = sadd.s32 0, 0
      %s16 = smul.u32 8, %s15
      %s18 = ssub.s32 1024, 1024
      %19 = vsyncadd [#allocation3], %s18
      %s20 = smul.addr %s16, 128
      %s21 = scalar_lea.hbm %s0, %s20
      %s23 = sshll.u32 [#allocation2], 4
      %s24 = int_to_ptr.vmem [resolvable:$true] %s23
      %26 = dma.hbm_to_vmem [thread:$0]  %s21, 1024, %s24, [#allocation3]
    $region5: #{tpu_custom_call.1} parent=1 // pred_fallthru
      _
    // Predicated region
    $region6: #{tpu_custom_call.1} parent=1 // pred_check
      _
    $region7: #{tpu_custom_call.1} parent=1 // pred_check_branch
      %28 = sbr.rel (0) target = $region9
    $region8: #{tpu_custom_call.1} parent=1 // pred_region
      %s29 = sadd.s32 0, 0
      %s30 = smul.u32 8, %s29
      %s32 = ssub.s32 1024, 1024
      %33 = vsyncadd [#allocation6], %s32
      %s34 = smul.addr %s30, 128
      %s35 = scalar_lea.hbm %s1, %s34
      %s37 = sshll.u32 [#allocation5], 4
      %s38 = int_to_ptr.vmem [resolvable:$true] %s37
      %40 = dma.hbm_to_vmem [thread:$0]  %s35, 1024, %s38, [#allocation6]
    $region9: #{tpu_custom_call.1} parent=1 // pred_fallthru
      _
    // Predicated region
    $region10: #{tpu_custom_call.1} parent=1 // pred_check
      _
    $region11: #{tpu_custom_call.1} parent=1 // pred_check_branch
      %42 = sbr.rel (0) target = $region13
    $region12: #{tpu_custom_call.1} parent=1 // pred_region
      %43 = dma.done [#allocation3], 1024
    $region13: #{tpu_custom_call.1} parent=1 // pred_fallthru
      _
    // Predicated region
    $region14: #{tpu_custom_call.1} parent=1 // pred_check
      _
    $region15: #{tpu_custom_call.1} parent=1 // pred_check_branch
      %45 = sbr.rel (0) target = $region17
    $region16: #{tpu_custom_call.1} parent=1 // pred_region
      %46 = dma.done [#allocation6], 1024
    $region17: #{tpu_custom_call.1} parent=1 // pred_fallthru
      _
    %s47 = sadd.s32 0, 0
    %s48 = smul.u32 8, %s47
    %s49 = sadd.s32 0, 0
    %s50 = smul.u32 8, %s49
    %p51 = scmp.eq.s32.totalorder 0, 0
    // Predicated region
    $region18: #{tpu_custom_call.1} parent=1 // pred_check
      %p52 = pneg %p51
    $region19: #{tpu_custom_call.1} parent=1 // pred_check_branch
      %54 = sbr.rel (%p52) target = $region21
    $region20: #{tpu_custom_call.1} parent=1 // pred_region
      %55 = vst [vmem:[#allocation7] sm:$0xff] 0.0
      %56 = vst [vmem:[#allocation8] sm:$0xff] 0.0
    $region21: #{tpu_custom_call.1} parent=1 // pred_fallthru
      _
    %v57 = vld [vmem:[#allocation2] sm:$0xff]
    %v58 = vld [vmem:[#allocation5] sm:$0xff]
    %v59 = vmul.f32 %v58, %v57
    %v60 = vadd.f32 %v58, %v57
    %v61 = vadd.f32 %v59, 0.0
    %v62 = vadd.f32 %v60, 0.0
    %v63 = vld [vmem:[#allocation2 + $0x8] sm:$0xff]
    %v64 = vld [vmem:[#allocation5 + $0x8] sm:$0xff]
    %v65 = vmul.f32 %v64, %v63
    %v66 = vadd.f32 %v64, %v63
    %v67 = vadd.f32 %v61, %v65
    %v68 = vadd.f32 %v62, %v66
    %v69 = vld [vmem:[#allocation2 + $0x10] sm:$0xff]
    %v70 = vld [vmem:[#allocation5 + $0x10] sm:$0xff]
    %v71 = vmul.f32 %v70, %v69
    %v72 = vadd.f32 %v70, %v69
    %v73 = vadd.f32 %v67, %v71
    %v74 = vadd.f32 %v68, %v72
    %v75 = vld [vmem:[#allocation2 + $0x18] sm:$0xff]
    %v76 = vld [vmem:[#allocation5 + $0x18] sm:$0xff]
    %v77 = vmul.f32 %v76, %v75
    %v78 = vadd.f32 %v76, %v75
    %v79 = vadd.f32 %v73, %v77
    %v80 = vadd.f32 %v74, %v78
    %v81 = vld [vmem:[#allocation2 + $0x20] sm:$0xff]
    %v82 = vld [vmem:[#allocation5 + $0x20] sm:$0xff]
    %v83 = vmul.f32 %v82, %v81
    %v84 = vadd.f32 %v82, %v81
    %v85 = vadd.f32 %v79, %v83
    %v86 = vadd.f32 %v80, %v84
    %v87 = vld [vmem:[#allocation2 + $0x28] sm:$0xff]
    %v88 = vld [vmem:[#allocation5 + $0x28] sm:$0xff]
    %v89 = vmul.f32 %v88, %v87
    %v90 = vadd.f32 %v88, %v87
    %v91 = vadd.f32 %v85, %v89
    %v92 = vadd.f32 %v86, %v90
    %v93 = vld [vmem:[#allocation2 + $0x30] sm:$0xff]
    %v94 = vld [vmem:[#allocation5 + $0x30] sm:$0xff]
    %v95 = vmul.f32 %v94, %v93
    %v96 = vadd.f32 %v94, %v93
    %v97 = vadd.f32 %v91, %v95
    %v98 = vadd.f32 %v92, %v96
    %v99 = vld [vmem:[#allocation2 + $0x38] sm:$0xff]
    %v100 = vld [vmem:[#allocation5 + $0x38] sm:$0xff]
    %v101 = vmul.f32 %v100, %v99
    %v102 = vadd.f32 %v100, %v99
    %v103 = vadd.f32 %v97, %v101
    %v104 = vadd.f32 %v98, %v102
    %v105 = vld [vmem:[#allocation7] sm:$0xff]
    %v106 = vadd.f32 %v105, %v103
    %107 = vst [vmem:[#allocation7] sm:$0xff] %v106
    %v108 = vld [vmem:[#allocation8] sm:$0xff]
    %v109 = vadd.f32 %v108, %v104
    %110 = vst [vmem:[#allocation8] sm:$0xff] %v109
    // Predicated region
    $region22: #{tpu_custom_call.1} parent=1 // pred_check
      _
    $region23: #{tpu_custom_call.1} parent=1 // pred_check_branch
      %112 = sbr.rel (0) target = $region25
    $region24: #{tpu_custom_call.1} parent=1 // pred_region
      %s114 = ssub.s32 128, 128
      %115 = vsyncadd [#allocation4], %s114
      %s117 = sshll.u32 [#allocation7], 4
      %s118 = int_to_ptr.vmem [resolvable:$true] %s117
      %120 = dma.vmem_to_hbm [thread:$0]  %s118, 128, %s2, [#allocation4]
    $region25: #{tpu_custom_call.1} parent=1 // pred_fallthru
      _
    // Predicated region
    $region26: #{tpu_custom_call.1} parent=1 // pred_check
      _
    $region27: #{tpu_custom_call.1} parent=1 // pred_check_branch
      %122 = sbr.rel (0) target = $region29
    $region28: #{tpu_custom_call.1} parent=1 // pred_region
      %s124 = ssub.s32 128, 128
      %125 = vsyncadd [#allocation9], %s124
      %s127 = sshll.u32 [#allocation8], 4
      %s128 = int_to_ptr.vmem [resolvable:$true] %s127
      %130 = dma.vmem_to_hbm [thread:$0]  %s128, 128, %s3, [#allocation9]
    $region29: #{tpu_custom_call.1} parent=1 // pred_fallthru
      _
    // Predicated region
    $region30: #{tpu_custom_call.1} parent=1 // pred_check
      _
    $region31: #{tpu_custom_call.1} parent=1 // pred_check_branch
      %132 = sbr.rel (0) target = $region33
    $region32: #{tpu_custom_call.1} parent=1 // pred_region
      %133 = dma.done [#allocation4], 128
    $region33: #{tpu_custom_call.1} parent=1 // pred_fallthru
      _
    // Predicated region
    $region34: #{tpu_custom_call.1} parent=1 // pred_check
      _
    $region35: #{tpu_custom_call.1} parent=1 // pred_check_branch
      %135 = sbr.rel (0) target = $region37
    $region36: #{tpu_custom_call.1} parent=1 // pred_region
      %136 = dma.done [#allocation9], 128
    $region37: #{tpu_custom_call.1} parent=1 // pred_fallthru
      _
    %137 = vsyncpa [#allocation3], 1
    %138 = vsyncpa [#allocation6], 1
    %139 = vsyncpa [#allocation4], 1
    %140 = vsyncpa [#allocation9], 1

</llo_original>
